<compile_context>
chip_gen: v5e
topology: v5e:2x2
jax: 0.10.0
libtpu: 0.0.40
codegen_flags: <defaults>
</compile_context>

<pallas_src>
import jax
import jax.numpy as jnp
from jax.experimental import pallas as pl
from jax.experimental.pallas import tpu as pltpu

IN_FEATURES = 784
NUM_CLASSES = 10
LANE = 128


def _round_up(x, m):
    return ((x + m - 1) // m) * m


def _mlp_kernel(x_ref, w1_ref, b1_ref, w2_ref, b2_ref, o_ref):
    # x_ref:  (TB, 784)  bf16   streamed per batch tile
    # w1_ref: (784, Hp)  bf16   VMEM-resident (constant index_map), Hp = hidden padded to 128
    # b1_ref: (1, Hp)    f32    resident
    # w2_ref: (Hp, 128)  bf16   resident (class dim padded to 128 lanes)
    # b2_ref: (1, 128)   f32    resident
    # o_ref:  (TB, 128)  f32    log_softmax; cols >= 10 are junk (wrapper slices them off)

    # layer 1 on the MXU (bf16 in, f32 accumulate) + sigmoid epilogue in f32
    h = jnp.dot(x_ref[...], w1_ref[...], preferred_element_type=jnp.float32) + b1_ref[...]
    # sigmoid as a single EUP transcendental (tanh) instead of exp + reciprocal
    h = 0.5 * (jnp.tanh(0.5 * h) + 1.0)

    # layer 2 on the MXU (bf16 in, f32 accumulate)
    logits = jnp.dot(h.astype(jnp.bfloat16), w2_ref[...],
                     preferred_element_type=jnp.float32) + b2_ref[...]

    # masked, numerically-stable log_softmax over the first NUM_CLASSES lanes.
    # Padded logit lanes are exactly 0; mask them to -inf so nothing leaks.
    col = jax.lax.broadcasted_iota(jnp.int32, logits.shape, dimension=1)
    valid = col < NUM_CLASSES
    neg_inf = jnp.float32(-jnp.inf)
    m = jnp.max(jnp.where(valid, logits, neg_inf), axis=-1, keepdims=True)
    e = jnp.where(valid, jnp.exp(logits - m), 0.0)
    lse = jnp.log(jnp.sum(e, axis=-1, keepdims=True))
    # padded columns hold finite garbage; the wrapper slices them away.
    o_ref[...] = (logits - m - lse).astype(o_ref.dtype)


def prepare_params(w1, b1, w2, b2):
    """Pad hidden/class dims to 128 lanes and pre-cast weights to bf16.

    Call ONCE (at init / outside the step fn), not per forward call.  Zero
    padding is inert: padded hidden units give sigmoid(0)=0.5 but hit zero w2
    rows; padded logit lanes are masked to -inf inside the kernel.
    """
    H = w1.shape[1]
    Hp = _round_up(H, LANE)
    NP = LANE
    w1p = jnp.zeros((IN_FEATURES, Hp), jnp.float32).at[:, :H].set(w1).astype(jnp.bfloat16)
    b1p = jnp.zeros((1, Hp), jnp.float32).at[:, :H].set(jnp.reshape(b1, (1, H)))
    w2p = jnp.zeros((Hp, NP), jnp.float32).at[:H, :NUM_CLASSES].set(w2).astype(jnp.bfloat16)
    b2p = jnp.zeros((1, NP), jnp.float32).at[:, :NUM_CLASSES].set(
        jnp.reshape(b2, (1, NUM_CLASSES)))
    return w1p, b1p, w2p, b2p


@jax.jit
def mnist_net_forward(x_nchw, w1p, b1p, w2p, b2p):
    """x_nchw: (B, 1, 28, 28). Params from prepare_params() (padded, bf16 weights).
    Returns (B, 10) float32 log-probabilities (same semantics as MNISTNet.forward)."""
    B = x_nchw.shape[0]
    Hp = w1p.shape[1]
    NP = w2p.shape[1]

    # Stream the dominant HBM read (x) as bf16: halves DMA bytes + the x
    # double-buffer and removes the per-tile in-kernel cast.
    x = x_nchw.reshape(B, IN_FEATURES).astype(jnp.bfloat16)

    # Batch tile: big tiles amortize the ~0.35us/grid-step overhead; cap at 1024
    # rows (1024x784 bf16 ~ 1.6 MiB per buffer, double-buffered -> well inside
    # every generation's scoped-VMEM default).  TB <= ceil(B/2) keeps >= 2 grid
    # steps for B >= 16 so the "parallel" axis shards across v7x's 2 TensorCores.
    TB = min(1024, _round_up(max(pl.cdiv(B, 2), 1), 8))
    grid = (pl.cdiv(B, TB),)

    cost = pl.CostEstimate(
        flops=2 * B * (IN_FEATURES * Hp + Hp * NP),
        transcendentals=B * (Hp + NP),
        bytes_accessed=(B * IN_FEATURES * 2          # x (bf16)
                        + B * NP * 4                 # padded output (f32)
                        + IN_FEATURES * Hp * 2       # w1 (bf16)
                        + Hp * NP * 2                # w2 (bf16)
                        + (Hp + NP) * 4),            # biases (f32)
    )

    out = pl.pallas_call(
        _mlp_kernel,
        out_shape=jax.ShapeDtypeStruct((B, NP), jnp.float32),
        grid_spec=pl.GridSpec(
            grid=grid,
            in_specs=[
                pl.BlockSpec((TB, IN_FEATURES), lambda i: (i, 0)),  # streamed bf16 x
                pl.BlockSpec((IN_FEATURES, Hp), lambda i: (0, 0)),  # resident bf16 w1
                pl.BlockSpec((1, Hp),           lambda i: (0, 0)),  # resident f32 b1
                pl.BlockSpec((Hp, NP),          lambda i: (0, 0)),  # resident bf16 w2
                pl.BlockSpec((1, NP),           lambda i: (0, 0)),  # resident f32 b2
            ],
            # 128-lane padded output -> unmasked full-lane vst (do NOT shrink to 10)
            out_specs=pl.BlockSpec((TB, NP), lambda i: (i, 0)),
        ),
        compiler_params=pltpu.CompilerParams(
            dimension_semantics=("parallel",)),  # batch tiles across v7x's 2 TCs
        cost_estimate=cost,
    )(x, w1p, b1p, w2p, b2p)

    # slice the real 10 classes back out (keeps the nn.Module's (B, 10) contract)
    return out[:, :NUM_CLASSES]


def init_params(key, hidden):
    """Deterministic init mimicking nn.Linear shapes (stored as (in, out))."""
    k1, k2, k3, k4 = jax.random.split(key, 4)
    lim1 = 1.0 / (IN_FEATURES ** 0.5)
    lim2 = 1.0 / (float(hidden) ** 0.5)
    w1 = jax.random.uniform(k1, (IN_FEATURES, hidden), jnp.float32, -lim1, lim1)
    b1 = jax.random.uniform(k2, (1, hidden), jnp.float32, -lim1, lim1)
    w2 = jax.random.uniform(k3, (hidden, NUM_CLASSES), jnp.float32, -lim2, lim2)
    b2 = jax.random.uniform(k4, (1, NUM_CLASSES), jnp.float32, -lim2, lim2)
    return w1, b1, w2, b2


if __name__ == "__main__":
    hidden = 32
    batch = 8

    key = jax.random.PRNGKey(0)
    kx, kp = jax.random.split(key)
    x = jax.random.normal(kx, (batch, 1, 28, 28), jnp.float32)  # NCHW, like torch
    w1, b1, w2, b2 = init_params(kp, hidden)

    # pad + bf16-cast weights ONCE, outside the per-call path
    w1p, b1p, w2p, b2p = prepare_params(w1, b1, w2, b2)

    out = mnist_net_forward(x, w1p, b1p, w2p, b2p)
    out = jax.block_until_ready(out)

    # reference check in plain f32 JAX (kernel uses bf16 MXU inputs, so allow a
    # modest tolerance)
    xr = x.reshape(batch, IN_FEATURES)
    h = jax.nn.sigmoid(xr @ w1 + b1)
    logits = h @ w2 + b2
    ref = jax.nn.log_softmax(logits, axis=1)
    assert out.shape == (batch, NUM_CLASSES)
    assert jnp.allclose(out, ref, atol=3e-2, rtol=3e-2), float(jnp.max(jnp.abs(out - ref)))
    # log-probs of each row should sum to ~1 after exp
    assert jnp.allclose(jnp.sum(jnp.exp(out), axis=1), 1.0, atol=1e-3)

    print("KERNEL_OK")
</pallas_src>

<mosaic_0001>
module attributes {stable_mosaic.version = 11 : i64} {
  func.func @_mlp_kernel(%arg0: i32, %arg1: memref<8x784xbf16, #tpu.memory_space<vmem>>, %arg2: memref<784x128xbf16, #tpu.memory_space<vmem>>, %arg3: memref<1x128xf32, #tpu.memory_space<vmem>>, %arg4: memref<128x128xbf16, #tpu.memory_space<vmem>>, %arg5: memref<1x128xf32, #tpu.memory_space<vmem>>, %arg6: memref<8x128xf32, #tpu.memory_space<vmem>>) attributes {dimension_semantics = [#tpu.dimension_semantics<parallel>], iteration_bounds = array<i64: 1>, scalar_prefetch = 0 : i64, scratch_operands = 0 : i64, tpu.core_type = #tpu.core_type<tc>, window_params = [{transform_indices = @transform_0, window_bounds = array<i64: 8, 784>}, {pipeline_mode = #tpu.pipeline_mode<synchronous>, transform_indices = @transform_1, window_bounds = array<i64: 784, 128>}, {pipeline_mode = #tpu.pipeline_mode<synchronous>, transform_indices = @transform_2, window_bounds = array<i64: 1, 128>}, {pipeline_mode = #tpu.pipeline_mode<synchronous>, transform_indices = @transform_3, window_bounds = array<i64: 128, 128>}, {pipeline_mode = #tpu.pipeline_mode<synchronous>, transform_indices = @transform_4, window_bounds = array<i64: 1, 128>}, {transform_indices = @transform_5, window_bounds = array<i64: 8, 128>}]} {
    %c0 = arith.constant 0 : index
    %c0_0 = arith.constant 0 : index
    %0 = vector.load %arg1[%c0, %c0_0] : memref<8x784xbf16, #tpu.memory_space<vmem>>, vector<8x784xbf16>
    %c0_1 = arith.constant 0 : index
    %c0_2 = arith.constant 0 : index
    %1 = vector.load %arg2[%c0_1, %c0_2] : memref<784x128xbf16, #tpu.memory_space<vmem>>, vector<784x128xbf16>
    %cst = arith.constant dense<0.000000e+00> : vector<8x128xf32>
    %2 = tpu.matmul %0, %1, %cst {dimension_numbers = #tpu.dot_dimension_numbers<[1], [0], [0], [1], [0, 0, 1, 1], [], []>} : vector<8x784xbf16>, vector<784x128xbf16>, vector<8x128xf32> -> vector<8x128xf32>
    %c0_3 = arith.constant 0 : index
    %c0_4 = arith.constant 0 : index
    %3 = vector.load %arg3[%c0_3, %c0_4] : memref<1x128xf32, #tpu.memory_space<vmem>>, vector<1x128xf32>
    %4 = vector.broadcast %3 : vector<1x128xf32> to vector<8x128xf32>
    %5 = arith.addf %2, %4 : vector<8x128xf32>
    %cst_5 = arith.constant 5.000000e-01 : f32
    %6 = vector.broadcast %cst_5 : f32 to vector<8x128xf32>
    %7 = arith.mulf %6, %5 : vector<8x128xf32>
    %8 = math.tanh %7 : vector<8x128xf32>
    %cst_6 = arith.constant 1.000000e+00 : f32
    %9 = vector.broadcast %cst_6 : f32 to vector<8x128xf32>
    %10 = arith.addf %8, %9 : vector<8x128xf32>
    %cst_7 = arith.constant 5.000000e-01 : f32
    %11 = vector.broadcast %cst_7 : f32 to vector<8x128xf32>
    %12 = arith.mulf %11, %10 : vector<8x128xf32>
    %13 = arith.truncf %12 : vector<8x128xf32> to vector<8x128xbf16>
    %c0_8 = arith.constant 0 : index
    %c0_9 = arith.constant 0 : index
    %14 = vector.load %arg4[%c0_8, %c0_9] : memref<128x128xbf16, #tpu.memory_space<vmem>>, vector<128x128xbf16>
    %cst_10 = arith.constant dense<0.000000e+00> : vector<8x128xf32>
    %15 = tpu.matmul %13, %14, %cst_10 {dimension_numbers = #tpu.dot_dimension_numbers<[1], [0], [0], [1], [0, 0, 1, 1], [], []>} : vector<8x128xbf16>, vector<128x128xbf16>, vector<8x128xf32> -> vector<8x128xf32>
    %c0_11 = arith.constant 0 : index
    %c0_12 = arith.constant 0 : index
    %16 = vector.load %arg5[%c0_11, %c0_12] : memref<1x128xf32, #tpu.memory_space<vmem>>, vector<1x128xf32>
    %17 = vector.broadcast %16 : vector<1x128xf32> to vector<8x128xf32>
    %18 = arith.addf %15, %17 : vector<8x128xf32>
    %19 = tpu.iota {dimensions = array<i32: 1>} : vector<8x128xi32>
    %c10_i32 = arith.constant 10 : i32
    %20 = vector.broadcast %c10_i32 : i32 to vector<8x128xi32>
    %21 = arith.cmpi slt, %19, %20 : vector<8x128xi32>
    %cst_13 = arith.constant 0xFF800000 : f32
    %22 = vector.broadcast %cst_13 : f32 to vector<8x128xf32>
    %23 = arith.select %21, %18, %22 : vector<8x128xi1>, vector<8x128xf32>
    %cst_14 = arith.constant dense<0xFF800000> : vector<8xf32>
    %24 = vector.multi_reduction <maximumf>, %23, %cst_14 [1] : vector<8x128xf32> to vector<8xf32>
    %25 = vector.shape_cast %24 : vector<8xf32> to vector<8x1xf32>
    %26 = vector.broadcast %25 : vector<8x1xf32> to vector<8x128xf32>
    %27 = arith.subf %18, %26 : vector<8x128xf32>
    %28 = math.exp %27 : vector<8x128xf32>
    %cst_15 = arith.constant 0.000000e+00 : f32
    %29 = vector.broadcast %cst_15 : f32 to vector<8x128xf32>
    %30 = arith.select %21, %28, %29 : vector<8x128xi1>, vector<8x128xf32>
    %cst_16 = arith.constant dense<0.000000e+00> : vector<8xf32>
    %31 = vector.multi_reduction <add>, %30, %cst_16 [1] : vector<8x128xf32> to vector<8xf32>
    %32 = vector.shape_cast %31 : vector<8xf32> to vector<8x1xf32>
    %33 = math.log %32 : vector<8x1xf32>
    %34 = vector.broadcast %25 : vector<8x1xf32> to vector<8x128xf32>
    %35 = arith.subf %18, %34 : vector<8x128xf32>
    %36 = vector.broadcast %33 : vector<8x1xf32> to vector<8x128xf32>
    %37 = arith.subf %35, %36 : vector<8x128xf32>
    %c0_17 = arith.constant 0 : index
    %c0_18 = arith.constant 0 : index
    %38 = vector.load %arg6[%c0_17, %c0_18] : memref<8x128xf32, #tpu.memory_space<vmem>>, vector<8x128xf32>
    tpu.vector_store %arg6[%c0_17, %c0_18], %37 {strides = array<i32>} : memref<8x128xf32, #tpu.memory_space<vmem>>, vector<8x128xf32>,
    return
  }
  func.func @transform_0(%arg0: i32) -> (i32, i32) {
    %c0_i32 = arith.constant 0 : i32
    %c0_i32_0 = arith.constant 0 : i32
    return %arg0, %c0_i32 : i32, i32
  }
  func.func @transform_1(%arg0: i32) -> (i32, i32) {
    %c0_i32 = arith.constant 0 : i32
    %c0_i32_0 = arith.constant 0 : i32
    %c0_i32_1 = arith.constant 0 : i32
    return %c0_i32, %c0_i32_0 : i32, i32
  }
  func.func @transform_2(%arg0: i32) -> (i32, i32) {
    %c0_i32 = arith.constant 0 : i32
    %c0_i32_0 = arith.constant 0 : i32
    %c0_i32_1 = arith.constant 0 : i32
    return %c0_i32, %c0_i32_0 : i32, i32
  }
  func.func @transform_3(%arg0: i32) -> (i32, i32) {
    %c0_i32 = arith.constant 0 : i32
    %c0_i32_0 = arith.constant 0 : i32
    %c0_i32_1 = arith.constant 0 : i32
    return %c0_i32, %c0_i32_0 : i32, i32
  }
  func.func @transform_4(%arg0: i32) -> (i32, i32) {
    %c0_i32 = arith.constant 0 : i32
    %c0_i32_0 = arith.constant 0 : i32
    %c0_i32_1 = arith.constant 0 : i32
    return %c0_i32, %c0_i32_0 : i32, i32
  }
  func.func @transform_5(%arg0: i32) -> (i32, i32) {
    %c0_i32 = arith.constant 0 : i32
    %c0_i32_0 = arith.constant 0 : i32
    return %arg0, %c0_i32 : i32, i32
  }
}

</mosaic_0001>

<llo_original>
// kernel: mnist_net_forward.1
$region0: #{mnist_net_forward.1}
  #allocation0 [shape = 'u32[]', space=smem, size = 0x4, offset = 0x4, fixed_abs, tag = 'smem constant byte address 0x4 - core index']
  #allocation1 [shape = 'u32[72,128]{1,0:T(1,128)}', space=vmem, size = 0x9000, scoped, tag = 'internal scratch']
  %s0 = inlined_call_operand.vmem [shape: bf16[8,784], index: 0, kind: input, shape index: {}]
  %s1 = inlined_call_operand.vmem [shape: bf16[784,128], index: 1, kind: input, shape index: {}]
  %s2 = inlined_call_operand.vmem [shape: f32[1,128], index: 2, kind: input, shape index: {}]
  %s3 = inlined_call_operand.vmem [shape: bf16[128,128], index: 3, kind: input, shape index: {}]
  %s4 = inlined_call_operand.vmem [shape: f32[1,128], index: 4, kind: input, shape index: {}]
  %s5 = inlined_call_operand.hbm [shape: f32[8,128], index: 5, kind: output, shape index: {}]
  %s6 = sld [smem:[#allocation0]]
  $region30: #{mnist_net_forward.1} parent=0
    _
  %s8 = ssub.s32 1, %s6
  %s9 = scalar_select 0, %s8, %s6
  $region1: #{mnist_net_forward.1} parent=0
    #allocation2 [shape = 'u8[4096]{0}', space=vmem, size = 0x1000, scoped, tag = 'output window, operand 0, single buffered']
    #allocation3 [shape = 's32[1]{0}', space=sflag, size = 0x4, scoped, tag = 'scoped memory for mnist_net_forward.1']
    %10 = vsyncpa [#allocation3], 0
    // Predicated region
    $region2: #{mnist_net_forward.1} parent=1 // pred_check
      _
    $region3: #{mnist_net_forward.1} parent=1 // pred_check_branch
      %12 = sbr.rel (0) target = $region5
    $region4: #{mnist_net_forward.1} parent=1 // pred_region
      _
    $region5: #{mnist_net_forward.1} parent=1 // pred_fallthru
      _
    // Predicated region
    $region6: #{mnist_net_forward.1} parent=1 // pred_check
      _
    $region7: #{mnist_net_forward.1} parent=1 // pred_check_branch
      %14 = sbr.rel (0) target = $region9
    $region8: #{mnist_net_forward.1} parent=1 // pred_region
      _
    $region9: #{mnist_net_forward.1} parent=1 // pred_fallthru
      _
    // Predicated region
    $region10: #{mnist_net_forward.1} parent=1 // pred_check
      _
    $region11: #{mnist_net_forward.1} parent=1 // pred_check_branch
      %16 = sbr.rel (0) target = $region13
    $region12: #{mnist_net_forward.1} parent=1 // pred_region
      _
    $region13: #{mnist_net_forward.1} parent=1 // pred_fallthru
      _
    // Predicated region
    $region14: #{mnist_net_forward.1} parent=1 // pred_check
      _
    $region15: #{mnist_net_forward.1} parent=1 // pred_check_branch
      %18 = sbr.rel (0) target = $region17
    $region16: #{mnist_net_forward.1} parent=1 // pred_region
      _
    $region17: #{mnist_net_forward.1} parent=1 // pred_fallthru
      _
    // Predicated region
    $region18: #{mnist_net_forward.1} parent=1 // pred_check
      _
    $region19: #{mnist_net_forward.1} parent=1 // pred_check_branch
      %20 = sbr.rel (0) target = $region21
    $region20: #{mnist_net_forward.1} parent=1 // pred_region
      _
    $region21: #{mnist_net_forward.1} parent=1 // pred_fallthru
      _
    %v22 = vld [vmem:[%s0] sm:$0xff]
    %v23 = vld [vmem:[%s0 + $0x8] sm:$0xff]
    %v24 = vld [vmem:[%s0 + $0x10] sm:$0xff]
    %v25 = vld [vmem:[%s0 + $0x18] sm:$0xf]
    %v26 = vld [vmem:[%s1] sm:$0xf]
    %v27 = vld [vmem:[%s1 + $0x4] sm:$0xf]
    %v28 = vld [vmem:[%s1 + $0x8] sm:$0xf]
    %v29 = vld [vmem:[%s1 + $0xc] sm:$0xf]
    %v30 = vld [vmem:[%s1 + $0x10] sm:$0xf]
    %v31 = vld [vmem:[%s1 + $0x14] sm:$0xf]
    %v32 = vld [vmem:[%s1 + $0x18] sm:$0xf]
    %v33 = vld [vmem:[%s1 + $0x1c] sm:$0xf]
    %v34 = vld [vmem:[%s1 + $0x20] sm:$0xf]
    %v35 = vld [vmem:[%s1 + $0x24] sm:$0xf]
    %v36 = vld [vmem:[%s1 + $0x28] sm:$0xf]
    %v37 = vld [vmem:[%s1 + $0x2c] sm:$0xf]
    %v38 = vld [vmem:[%s1 + $0x30] sm:$0xf]
    %v39 = vld [vmem:[%s1 + $0x34] sm:$0xf]
    %v40 = vld [vmem:[%s1 + $0x38] sm:$0xf]
    %v41 = vld [vmem:[%s1 + $0x3c] sm:$0xf]
    %v42 = vld [vmem:[%s1 + $0x40] sm:$0xf]
    %v43 = vld [vmem:[%s1 + $0x44] sm:$0xf]
    %v44 = vld [vmem:[%s1 + $0x48] sm:$0xf]
    %v45 = vld [vmem:[%s1 + $0x4c] sm:$0xf]
    %v46 = vld [vmem:[%s1 + $0x50] sm:$0xf]
    %v47 = vld [vmem:[%s1 + $0x54] sm:$0xf]
    %v48 = vld [vmem:[%s1 + $0x58] sm:$0xf]
    %v49 = vld [vmem:[%s1 + $0x5c] sm:$0xf]
    %v50 = vld [vmem:[%s1 + $0x60] sm:$0xf]
    %v51 = vld [vmem:[%s1 + $0x64] sm:$0xf]
    %v52 = vld [vmem:[%s1 + $0x68] sm:$0xf]
    %v53 = vld [vmem:[%s1 + $0x6c] sm:$0xf]
    %v54 = vld [vmem:[%s1 + $0x70] sm:$0xf]
    %v55 = vld [vmem:[%s1 + $0x74] sm:$0xf]
    %v56 = vld [vmem:[%s1 + $0x78] sm:$0xf]
    %v57 = vld [vmem:[%s1 + $0x7c] sm:$0xf]
    %v58 = vld [vmem:[%s1 + $0x80] sm:$0xf]
    %v59 = vld [vmem:[%s1 + $0x84] sm:$0xf]
    %v60 = vld [vmem:[%s1 + $0x88] sm:$0xf]
    %v61 = vld [vmem:[%s1 + $0x8c] sm:$0xf]
    %v62 = vld [vmem:[%s1 + $0x90] sm:$0xf]
    %v63 = vld [vmem:[%s1 + $0x94] sm:$0xf]
    %v64 = vld [vmem:[%s1 + $0x98] sm:$0xf]
    %v65 = vld [vmem:[%s1 + $0x9c] sm:$0xf]
    %v66 = vld [vmem:[%s1 + $0xa0] sm:$0xf]
    %v67 = vld [vmem:[%s1 + $0xa4] sm:$0xf]
    %v68 = vld [vmem:[%s1 + $0xa8] sm:$0xf]
    %v69 = vld [vmem:[%s1 + $0xac] sm:$0xf]
    %v70 = vld [vmem:[%s1 + $0xb0] sm:$0xf]
    %v71 = vld [vmem:[%s1 + $0xb4] sm:$0xf]
    %v72 = vld [vmem:[%s1 + $0xb8] sm:$0xf]
    %v73 = vld [vmem:[%s1 + $0xbc] sm:$0xf]
    %v74 = vld [vmem:[%s1 + $0xc0] sm:$0xf]
    %v75 = vld [vmem:[%s1 + $0xc4] sm:$0xf]
    %v76 = vld [vmem:[%s1 + $0xc8] sm:$0xf]
    %v77 = vld [vmem:[%s1 + $0xcc] sm:$0xf]
    %v78 = vld [vmem:[%s1 + $0xd0] sm:$0xf]
    %v79 = vld [vmem:[%s1 + $0xd4] sm:$0xf]
    %v80 = vld [vmem:[%s1 + $0xd8] sm:$0xf]
    %v81 = vld [vmem:[%s1 + $0xdc] sm:$0xf]
    %v82 = vld [vmem:[%s1 + $0xe0] sm:$0xf]
    %v83 = vld [vmem:[%s1 + $0xe4] sm:$0xf]
    %v84 = vld [vmem:[%s1 + $0xe8] sm:$0xf]
    %v85 = vld [vmem:[%s1 + $0xec] sm:$0xf]
    %v86 = vld [vmem:[%s1 + $0xf0] sm:$0xf]
    %v87 = vld [vmem:[%s1 + $0xf4] sm:$0xf]
    %v88 = vld [vmem:[%s1 + $0xf8] sm:$0xf]
    %v89 = vld [vmem:[%s1 + $0xfc] sm:$0xf]
    %v90 = vld [vmem:[%s1 + $0x100] sm:$0xf]
    %v91 = vld [vmem:[%s1 + $0x104] sm:$0xf]
    %v92 = vld [vmem:[%s1 + $0x108] sm:$0xf]
    %v93 = vld [vmem:[%s1 + $0x10c] sm:$0xf]
    %v94 = vld [vmem:[%s1 + $0x110] sm:$0xf]
    %v95 = vld [vmem:[%s1 + $0x114] sm:$0xf]
    %v96 = vld [vmem:[%s1 + $0x118] sm:$0xf]
    %v97 = vld [vmem:[%s1 + $0x11c] sm:$0xf]
    %v98 = vld [vmem:[%s1 + $0x120] sm:$0xf]
    %v99 = vld [vmem:[%s1 + $0x124] sm:$0xf]
    %v100 = vld [vmem:[%s1 + $0x128] sm:$0xf]
    %v101 = vld [vmem:[%s1 + $0x12c] sm:$0xf]
    %v102 = vld [vmem:[%s1 + $0x130] sm:$0xf]
    %v103 = vld [vmem:[%s1 + $0x134] sm:$0xf]
    %v104 = vld [vmem:[%s1 + $0x138] sm:$0xf]
    %v105 = vld [vmem:[%s1 + $0x13c] sm:$0xf]
    %v106 = vld [vmem:[%s1 + $0x140] sm:$0xf]
    %v107 = vld [vmem:[%s1 + $0x144] sm:$0xf]
    %v108 = vld [vmem:[%s1 + $0x148] sm:$0xf]
    %v109 = vld [vmem:[%s1 + $0x14c] sm:$0xf]
    %v110 = vld [vmem:[%s1 + $0x150] sm:$0xf]
    %v111 = vld [vmem:[%s1 + $0x154] sm:$0xf]
    %v112 = vld [vmem:[%s1 + $0x158] sm:$0xf]
    %v113 = vld [vmem:[%s1 + $0x15c] sm:$0xf]
    %v114 = vld [vmem:[%s1 + $0x160] sm:$0xf]
    %v115 = vld [vmem:[%s1 + $0x164] sm:$0xf]
    %v116 = vld [vmem:[%s1 + $0x168] sm:$0xf]
    %v117 = vld [vmem:[%s1 + $0x16c] sm:$0xf]
    %v118 = vld [vmem:[%s1 + $0x170] sm:$0xf]
    %v119 = vld [vmem:[%s1 + $0x174] sm:$0xf]
    %v120 = vld [vmem:[%s1 + $0x178] sm:$0xf]
    %v121 = vld [vmem:[%s1 + $0x17c] sm:$0xf]
    %v122 = vld [vmem:[%s1 + $0x180] sm:$0xf]
    %v123 = vld [vmem:[%s1 + $0x184] sm:$0xf]
    %v124 = vld [vmem:[%s2] sm:$0x1]
    %v126 = vperm.slane %v124, 0
    %v132 = vunpack.c.l.b16 %v22
    %v133 = vunpack.c.h.b16 %v22
    %v134 = vunpack.c.l.b16 %v23
    %v135 = vunpack.c.h.b16 %v23
    %v136 = vunpack.c.l.b16 %v24
    %v137 = vunpack.c.h.b16 %v24
    %v138 = vunpack.c.l.b16 %v25
    %v139 = vpack.c.b16 %v132, %v132
    %v140 = vpack.c.b16 %v133, %v133
    %v141 = vpack.c.b16 %v134, %v134
    %v142 = vpack.c.b16 %v135, %v135
    %v143 = vpack.c.b16 %v136, %v136
    %v144 = vpack.c.b16 %v137, %v137
    %v145 = vpack.c.b16 %v138, %v138
    %v250 = vunpack.c.l.b16 %v26
    %v251 = vunpack.c.l.b16 %v27
    %v252 = vunpack.c.l.b16 %v28
    %v253 = vunpack.c.l.b16 %v29
    %v254 = vunpack.c.l.b16 %v30
    %v255 = vunpack.c.l.b16 %v31
    %v256 = vunpack.c.l.b16 %v32
    %v257 = vunpack.c.l.b16 %v33
    %v258 = vunpack.c.l.b16 %v34
    %v259 = vunpack.c.l.b16 %v35
    %v260 = vunpack.c.l.b16 %v36
    %v261 = vunpack.c.l.b16 %v37
    %v262 = vunpack.c.l.b16 %v38
    %v263 = vunpack.c.l.b16 %v39
    %v264 = vunpack.c.l.b16 %v40
    %v265 = vunpack.c.l.b16 %v41
    %v266 = vunpack.c.l.b16 %v42
    %v267 = vunpack.c.l.b16 %v43
    %v268 = vunpack.c.l.b16 %v44
    %v269 = vunpack.c.l.b16 %v45
    %v270 = vunpack.c.l.b16 %v46
    %v271 = vunpack.c.l.b16 %v47
    %v272 = vunpack.c.l.b16 %v48
    %v273 = vunpack.c.l.b16 %v49
    %v274 = vunpack.c.l.b16 %v50
    %v275 = vunpack.c.l.b16 %v51
    %v276 = vunpack.c.l.b16 %v52
    %v277 = vunpack.c.l.b16 %v53
    %v278 = vunpack.c.l.b16 %v54
    %v279 = vunpack.c.l.b16 %v55
    %v280 = vunpack.c.l.b16 %v56
    %v281 = vunpack.c.l.b16 %v57
    %v282 = vunpack.c.l.b16 %v58
    %v283 = vunpack.c.l.b16 %v59
    %v284 = vunpack.c.l.b16 %v60
    %v285 = vunpack.c.l.b16 %v61
    %v286 = vunpack.c.l.b16 %v62
    %v287 = vunpack.c.l.b16 %v63
    %v288 = vunpack.c.l.b16 %v64
    %v289 = vunpack.c.l.b16 %v65
    %v290 = vunpack.c.l.b16 %v66
    %v291 = vunpack.c.l.b16 %v67
    %v292 = vunpack.c.l.b16 %v68
    %v293 = vunpack.c.l.b16 %v69
    %v294 = vunpack.c.l.b16 %v70
    %v295 = vunpack.c.l.b16 %v71
    %v296 = vunpack.c.l.b16 %v72
    %v297 = vunpack.c.l.b16 %v73
    %v298 = vunpack.c.l.b16 %v74
    %v299 = vunpack.c.l.b16 %v75
    %v300 = vunpack.c.l.b16 %v76
    %v301 = vunpack.c.l.b16 %v77
    %v302 = vunpack.c.l.b16 %v78
    %v303 = vunpack.c.l.b16 %v79
    %v304 = vunpack.c.l.b16 %v80
    %v305 = vunpack.c.l.b16 %v81
    %v306 = vunpack.c.l.b16 %v82
    %v307 = vunpack.c.l.b16 %v83
    %v308 = vunpack.c.l.b16 %v84
    %v309 = vunpack.c.l.b16 %v85
    %v310 = vunpack.c.l.b16 %v86
    %v311 = vunpack.c.l.b16 %v87
    %v312 = vunpack.c.l.b16 %v88
    %v313 = vunpack.c.l.b16 %v89
    %v314 = vunpack.c.l.b16 %v90
    %v315 = vunpack.c.l.b16 %v91
    %v316 = vunpack.c.l.b16 %v92
    %v317 = vunpack.c.l.b16 %v93
    %v318 = vunpack.c.l.b16 %v94
    %v319 = vunpack.c.l.b16 %v95
    %v320 = vunpack.c.l.b16 %v96
    %v321 = vunpack.c.l.b16 %v97
    %v322 = vunpack.c.l.b16 %v98
    %v323 = vunpack.c.l.b16 %v99
    %v324 = vunpack.c.l.b16 %v100
    %v325 = vunpack.c.l.b16 %v101
    %v326 = vunpack.c.l.b16 %v102
    %v327 = vunpack.c.l.b16 %v103
    %v328 = vunpack.c.l.b16 %v104
    %v329 = vunpack.c.l.b16 %v105
    %v330 = vunpack.c.l.b16 %v106
    %v331 = vunpack.c.l.b16 %v107
    %v332 = vunpack.c.l.b16 %v108
    %v333 = vunpack.c.l.b16 %v109
    %v334 = vunpack.c.l.b16 %v110
    %v335 = vunpack.c.l.b16 %v111
    %v336 = vunpack.c.l.b16 %v112
    %v337 = vunpack.c.l.b16 %v113
    %v338 = vunpack.c.l.b16 %v114
    %v339 = vunpack.c.l.b16 %v115
    %v340 = vunpack.c.l.b16 %v116
    %v341 = vunpack.c.l.b16 %v117
    %v342 = vunpack.c.l.b16 %v118
    %v343 = vunpack.c.l.b16 %v119
    %v344 = vunpack.c.l.b16 %v120
    %v345 = vunpack.c.l.b16 %v121
    %v346 = vunpack.c.l.b16 %v122
    %v347 = vunpack.c.l.b16 %v123
    %v348 = vpack.c.b16 %v251, %v250
    %v349 = vpack.c.b16 %v253, %v252
    %v350 = vpack.c.b16 %v255, %v254
    %v351 = vpack.c.b16 %v257, %v256
    %v352 = vpack.c.b16 %v259, %v258
    %v353 = vpack.c.b16 %v261, %v260
    %v354 = vpack.c.b16 %v263, %v262
    %v355 = vpack.c.b16 %v265, %v264
    %v356 = vpack.c.b16 %v267, %v266
    %v357 = vpack.c.b16 %v269, %v268
    %v358 = vpack.c.b16 %v271, %v270
    %v359 = vpack.c.b16 %v273, %v272
    %v360 = vpack.c.b16 %v275, %v274
    %v361 = vpack.c.b16 %v277, %v276
    %v362 = vpack.c.b16 %v279, %v278
    %v363 = vpack.c.b16 %v281, %v280
    %v364 = vpack.c.b16 %v283, %v282
    %v365 = vpack.c.b16 %v285, %v284
    %v366 = vpack.c.b16 %v287, %v286
    %v367 = vpack.c.b16 %v289, %v288
    %v368 = vpack.c.b16 %v291, %v290
    %v369 = vpack.c.b16 %v293, %v292
    %v370 = vpack.c.b16 %v295, %v294
    %v371 = vpack.c.b16 %v297, %v296
    %v372 = vpack.c.b16 %v299, %v298
    %v373 = vpack.c.b16 %v301, %v300
    %v374 = vpack.c.b16 %v303, %v302
    %v375 = vpack.c.b16 %v305, %v304
    %v376 = vpack.c.b16 %v307, %v306
    %v377 = vpack.c.b16 %v309, %v308
    %v378 = vpack.c.b16 %v311, %v310
    %v379 = vpack.c.b16 %v313, %v312
    %v380 = vpack.c.b16 %v315, %v314
    %v381 = vpack.c.b16 %v317, %v316
    %v382 = vpack.c.b16 %v319, %v318
    %v383 = vpack.c.b16 %v321, %v320
    %v384 = vpack.c.b16 %v323, %v322
    %v385 = vpack.c.b16 %v325, %v324
    %v386 = vpack.c.b16 %v327, %v326
    %v387 = vpack.c.b16 %v329, %v328
    %v388 = vpack.c.b16 %v331, %v330
    %v389 = vpack.c.b16 %v333, %v332
    %v390 = vpack.c.b16 %v335, %v334
    %v391 = vpack.c.b16 %v337, %v336
    %v392 = vpack.c.b16 %v339, %v338
    %v393 = vpack.c.b16 %v341, %v340
    %v394 = vpack.c.b16 %v343, %v342
    %v395 = vpack.c.b16 %v345, %v344
    %v396 = vpack.c.b16 %v347, %v346
    %vm446 = vcmask 130048
    %v448 = vsel %vm446, %v145, 0
    %450 = vmatpush.bf16.msra.mxu0 %v355
    %451 = vmatpush.bf16.msra.mxu0 %v354
    %452 = vmatpush.bf16.msra.mxu0 %v353
    %453 = vmatpush.bf16.msra.mxu0 %v352
    %454 = vmatpush.bf16.msra.mxu0 %v351
    %455 = vmatpush.bf16.msra.mxu0 %v350
    %456 = vmatpush.bf16.msra.mxu0 %v349
    %457 = vmatpush.bf16.msra.mxu0 %v348
    %458 = vmatmul.bf16.gmra.mxu0 %v139
    %v459 = vpop.f32.mrf.mxu0
    %v460 = vadd.f32 %v126, %v459
    %v461 = vpop.f32.mrf.mxu0
    %462 = vdwg.mxu0
    %463 = vmatpush.bf16.msra.mxu0 %v363
    %464 = vmatpush.bf16.msra.mxu0 %v362
    %465 = vmatpush.bf16.msra.mxu0 %v361
    %466 = vmatpush.bf16.msra.mxu0 %v360
    %467 = vmatpush.bf16.msra.mxu0 %v359
    %468 = vmatpush.bf16.msra.mxu0 %v358
    %469 = vmatpush.bf16.msra.mxu0 %v357
    %470 = vmatpush.bf16.msra.mxu0 %v356
    %471 = vmatmul.bf16.gmra.mxu0 %v140
    %v472 = vpop.f32.mrf.mxu0
    %v473 = vadd.f32 %v460, %v472
    %v474 = vpop.f32.mrf.mxu0
    %475 = vdwg.mxu0
    %476 = vmatpush.bf16.msra.mxu0 %v371
    %477 = vmatpush.bf16.msra.mxu0 %v370
    %478 = vmatpush.bf16.msra.mxu0 %v369
    %479 = vmatpush.bf16.msra.mxu0 %v368
    %480 = vmatpush.bf16.msra.mxu0 %v367
    %481 = vmatpush.bf16.msra.mxu0 %v366
    %482 = vmatpush.bf16.msra.mxu0 %v365
    %483 = vmatpush.bf16.msra.mxu0 %v364
    %484 = vmatmul.bf16.gmra.mxu0 %v141
    %v485 = vpop.f32.mrf.mxu0
    %v486 = vadd.f32 %v473, %v485
    %v487 = vpop.f32.mrf.mxu0
    %488 = vdwg.mxu0
    %489 = vmatpush.bf16.msra.mxu0 %v379
    %490 = vmatpush.bf16.msra.mxu0 %v378
    %491 = vmatpush.bf16.msra.mxu0 %v377
    %492 = vmatpush.bf16.msra.mxu0 %v376
    %493 = vmatpush.bf16.msra.mxu0 %v375
    %494 = vmatpush.bf16.msra.mxu0 %v374
    %495 = vmatpush.bf16.msra.mxu0 %v373
    %496 = vmatpush.bf16.msra.mxu0 %v372
    %497 = vmatmul.bf16.gmra.mxu0 %v142
    %v498 = vpop.f32.mrf.mxu0
    %v499 = vadd.f32 %v486, %v498
    %v500 = vpop.f32.mrf.mxu0
    %501 = vdwg.mxu0
    %502 = vmatpush.bf16.msra.mxu0 %v387
    %503 = vmatpush.bf16.msra.mxu0 %v386
    %504 = vmatpush.bf16.msra.mxu0 %v385
    %505 = vmatpush.bf16.msra.mxu0 %v384
    %506 = vmatpush.bf16.msra.mxu0 %v383
    %507 = vmatpush.bf16.msra.mxu0 %v382
    %508 = vmatpush.bf16.msra.mxu0 %v381
    %509 = vmatpush.bf16.msra.mxu0 %v380
    %510 = vmatmul.bf16.gmra.mxu0 %v143
    %v511 = vpop.f32.mrf.mxu0
    %v512 = vadd.f32 %v499, %v511
    %v513 = vpop.f32.mrf.mxu0
    %514 = vdwg.mxu0
    %515 = vmatpush.bf16.msra.mxu0 %v395
    %516 = vmatpush.bf16.msra.mxu0 %v394
    %517 = vmatpush.bf16.msra.mxu0 %v393
    %518 = vmatpush.bf16.msra.mxu0 %v392
    %519 = vmatpush.bf16.msra.mxu0 %v391
    %520 = vmatpush.bf16.msra.mxu0 %v390
    %521 = vmatpush.bf16.msra.mxu0 %v389
    %522 = vmatpush.bf16.msra.mxu0 %v388
    %523 = vmatmul.bf16.gmra.mxu0 %v144
    %v524 = vpop.f32.mrf.mxu0
    %v525 = vadd.f32 %v512, %v524
    %v526 = vpop.f32.mrf.mxu0
    %527 = vdwg.mxu0
    %528 = vmatpush.bf16.msra.mxu0 0
    %529 = vmatpush.bf16.msra.mxu0 0
    %530 = vmatpush.bf16.msra.mxu0 0
    %531 = vmatpush.bf16.msra.mxu0 0
    %532 = vmatpush.bf16.msra.mxu0 0
    %533 = vmatpush.bf16.msra.mxu0 0
    %534 = vmatpush.bf16.msra.mxu0 0
    %535 = vmatpush.bf16.msra.mxu0 %v396
    %536 = vmatmul.bf16.gmra.mxu0 %v448
    %v537 = vpop.f32.mrf.mxu0
    %v538 = vadd.f32 %v525, %v537
    %v539 = vpop.f32.mrf.mxu0
    %540 = vdwg.mxu0
    %v541 = vmul.f32 %v538, 0.5
    %v542 = vtanh.pop %v541
    %v543 = vadd.f32 %v542, 1.0
    %v544 = vmul.f32 %v543, 0.5
    %v545 = vpack.c.bf16 %v544, %v544
    %v546 = vld [vmem:[%s3] sm:$0xf]
    %v547 = vld [vmem:[%s3 + $0x4] sm:$0xf]
    %v548 = vld [vmem:[%s3 + $0x8] sm:$0xf]
    %v549 = vld [vmem:[%s3 + $0xc] sm:$0xf]
    %v550 = vld [vmem:[%s3 + $0x10] sm:$0xf]
    %v551 = vld [vmem:[%s3 + $0x14] sm:$0xf]
    %v552 = vld [vmem:[%s3 + $0x18] sm:$0xf]
    %v553 = vld [vmem:[%s3 + $0x1c] sm:$0xf]
    %v554 = vld [vmem:[%s3 + $0x20] sm:$0xf]
    %v555 = vld [vmem:[%s3 + $0x24] sm:$0xf]
    %v556 = vld [vmem:[%s3 + $0x28] sm:$0xf]
    %v557 = vld [vmem:[%s3 + $0x2c] sm:$0xf]
    %v558 = vld [vmem:[%s3 + $0x30] sm:$0xf]
    %v559 = vld [vmem:[%s3 + $0x34] sm:$0xf]
    %v560 = vld [vmem:[%s3 + $0x38] sm:$0xf]
    %v561 = vld [vmem:[%s3 + $0x3c] sm:$0xf]
    %v562 = vld [vmem:[%s4] sm:$0x1]
    %v564 = vperm.slane %v562, 0
    %v582 = vunpack.c.l.b16 %v546
    %v583 = vunpack.c.l.b16 %v547
    %v584 = vunpack.c.l.b16 %v548
    %v585 = vunpack.c.l.b16 %v549
    %v586 = vunpack.c.l.b16 %v550
    %v587 = vunpack.c.l.b16 %v551
    %v588 = vunpack.c.l.b16 %v552
    %v589 = vunpack.c.l.b16 %v553
    %v590 = vunpack.c.l.b16 %v554
    %v591 = vunpack.c.l.b16 %v555
    %v592 = vunpack.c.l.b16 %v556
    %v593 = vunpack.c.l.b16 %v557
    %v594 = vunpack.c.l.b16 %v558
    %v595 = vunpack.c.l.b16 %v559
    %v596 = vunpack.c.l.b16 %v560
    %v597 = vunpack.c.l.b16 %v561
    %v598 = vpack.c.b16 %v583, %v582
    %v599 = vpack.c.b16 %v585, %v584
    %v600 = vpack.c.b16 %v587, %v586
    %v601 = vpack.c.b16 %v589, %v588
    %v602 = vpack.c.b16 %v591, %v590
    %v603 = vpack.c.b16 %v593, %v592
    %v604 = vpack.c.b16 %v595, %v594
    %v605 = vpack.c.b16 %v597, %v596
    %614 = vmatpush.bf16.msra.mxu0 %v605
    %615 = vmatpush.bf16.msra.mxu0 %v604
    %616 = vmatpush.bf16.msra.mxu0 %v603
    %617 = vmatpush.bf16.msra.mxu0 %v602
    %618 = vmatpush.bf16.msra.mxu0 %v601
    %619 = vmatpush.bf16.msra.mxu0 %v600
    %620 = vmatpush.bf16.msra.mxu0 %v599
    %621 = vmatpush.bf16.msra.mxu0 %v598
    %622 = vmatmul.bf16.gmra.mxu0 %v545
    %v623 = vpop.f32.mrf.mxu0
    %v624 = vadd.f32 %v564, %v623
    %v625 = vpop.f32.mrf.mxu0
    %626 = vdwg.mxu0
    %v627 = vlaneseq
    %v628 = vand.u32 %v627, 127
    %vm629 = vcmp.lt.s32.totalorder %v628, 10
    %v630 = vsel %vm629, %v624, -inf
    %631 = vmax.xlane.f32.xlu0 %v630
    %v632 = vpop.xlane.xlu0 %631
    %v633 = vsub.f32 %v624, %v632
    %v634 = vmul.f32 %v633, 1.442695
    %v635 = vpow.pop %v634
    %v636 = vsel %vm629, %v635, 0.0
    %637 = vadd.xlane.f32.xlu0 %v636
    %v638 = vpop.xlane.xlu0 %637
    %v639 = vlog2.pop %v638
    %v640 = vmul.f32 %v639, 0.6931472
    %v641 = vsub.f32 %v633, %v640
    %642 = vst [vmem:[#allocation2] sm:$0xff] %v641
    // Predicated region
    $region22: #{mnist_net_forward.1} parent=1 // pred_check
      _
    $region23: #{mnist_net_forward.1} parent=1 // pred_check_branch
      %644 = sbr.rel (0) target = $region25
    $region24: #{mnist_net_forward.1} parent=1 // pred_region
      %646 = vsyncadd [#allocation3], 0
      %s648 = sshll.u32 [#allocation2], 4
      %s649 = int_to_ptr.vmem [resolvable:$true] %s648
      %s650 = sshll.u32 %s5, 4
      %s651 = int_to_ptr.hbm [resolvable:$true] %s650
      %653 = dma.vmem_to_hbm [thread:$0]  %s649, 128, %s651, [#allocation3]
    $region25: #{mnist_net_forward.1} parent=1 // pred_fallthru
      _
    // Predicated region
    $region26: #{mnist_net_forward.1} parent=1 // pred_check
      _
    $region27: #{mnist_net_forward.1} parent=1 // pred_check_branch
      %655 = sbr.rel (0) target = $region29
    $region28: #{mnist_net_forward.1} parent=1 // pred_region
      %657 = dma.done [#allocation3], 128
    $region29: #{mnist_net_forward.1} parent=1 // pred_fallthru
      _
    %658 = vsyncpa [#allocation3], 1

</llo_original>
